<compile_context>
chip_gen: v6e
topology: v6e:2x2x1
jax: 0.10.0
libtpu: 0.0.40
codegen_flags: <defaults>
</compile_context>

<pallas_src>
import functools
import math

import jax
import jax.numpy as jnp
from jax import lax
from jax.experimental import pallas as pl
from jax.experimental.pallas import tpu as pltpu

EPS = 1e-5
LANES = 128
LN2 = math.log(2.0)


def _cdiv(a, b):
    return -(-a // b)


def _round_up(a, b):
    return _cdiv(a, b) * b


def _dice_ce_kernel(pred_ref, gt_ref, acc_ref, *, tile_rows, chunk_rows,
                    k_steps, rows_valid, needs_mask):
    """One grid step: accumulate [sum(x*y), sum(x+y), sum(relu(x)+softplus(-|x|))].

    pred_ref / gt_ref : (1, TR, 128) blocks of one sample (native dtype).
    acc_ref           : (1, 1, 3, 128) f32 lane-partial accumulator, resident
                        across the innermost (reduction) grid axis.
    """
    s = pl.program_id(1)
    k = pl.program_id(2)

    @pl.when(k == 0)
    def _():
        acc_ref[...] = jnp.zeros_like(acc_ref)

    # Nominal first global (per-sample) row of this block; only used by mask.
    base_row = (s * k_steps + k) * tile_rows
    align = chunk_rows & (-chunk_rows)  # largest power of two dividing chunk

    def accum(r0, nrows, carry):
        tp_a, xy_a, s3_a = carry
        # Widen to f32 right after load (v5e has no bf16 VPU).
        x = pred_ref[0, pl.ds(r0, nrows), :].astype(jnp.float32)
        y = gt_ref[0, pl.ds(r0, nrows), :].astype(jnp.float32)
        if needs_mask:
            # Rows past the real data (tile-grid overhang) are zeroed; zeros
            # add 0 to tp/xy and exactly ln2 to s3, which the wrapper epilogue
            # subtracts -- no per-element BCE masking needed.
            rid = base_row + r0 + lax.broadcasted_iota(jnp.int32, (nrows, LANES), 0)
            ok = rid < rows_valid
            x = jnp.where(ok, x, 0.0)
            y = jnp.where(ok, y, 0.0)
        tp_a = tp_a + jnp.sum(x * y, axis=0, keepdims=True)          # (1,128)
        xy_a = xy_a + jnp.sum(x + y, axis=0, keepdims=True)          # (1,128)
        # Stable BCE-with-logits minus the -x*y term (recovered from tp in the
        # epilogue): relu(x) + log1p(exp(-|x|)).
        s3 = jnp.maximum(x, 0.0) + jnp.log1p(jnp.exp(-jnp.abs(x)))
        s3_a = s3_a + jnp.sum(s3, axis=0, keepdims=True)             # (1,128)
        return tp_a, xy_a, s3_a

    init = tuple(jnp.zeros((1, LANES), jnp.float32) for _ in range(3))

    if tile_rows == chunk_rows:
        carry = accum(0, tile_rows, init)
    else:
        nfull = tile_rows // chunk_rows
        carry = lax.fori_loop(
            0, nfull,
            lambda c, a: accum(pl.multiple_of(c * chunk_rows, align),
                               chunk_rows, a),
            init, unroll=2)
        rem = tile_rows - nfull * chunk_rows
        if rem:
            carry = accum(nfull * chunk_rows, rem, carry)

    tp_a, xy_a, s3_a = carry
    parts = jnp.concatenate([tp_a, xy_a, s3_a], axis=0)              # (3,128)
    acc_ref[...] += parts[None, None]


def dice_ce_loss(y_pred, y_true, *, beta=0.5, eps=EPS, tile_rows=8192,
                 chunk_rows=128):
    """Dice + BCEWithLogits loss. y_pred: logits, y_true: targets. Any (N, ...)
    layout -- everything after the batch dim is flattened (matches .view(N,-1))."""
    assert y_pred.shape[0] == y_true.shape[0]
    N = y_pred.shape[0]
    D = math.prod(y_pred.shape[1:])
    assert math.prod(y_true.shape[1:]) == D

    # Mosaic-friendly input dtypes only (f64 -> f32, bool -> f32).
    def canon(a):
        if a.dtype == jnp.bool_ or jnp.dtype(a.dtype).itemsize > 4:
            return a.astype(jnp.float32)
        return a

    y_pred = canon(y_pred)
    y_true = canon(y_true)
    isz_p = jnp.dtype(y_pred.dtype).itemsize
    isz_g = jnp.dtype(y_true.dtype).itemsize

    # Lane-dense per-sample layout: D -> (rows, 128).
    d_ceil = _round_up(D, LANES)
    rows = d_ceil // LANES

    # Sublane pack factor of the narrowest input (8 f32 / 16 bf16 / 32 int8).
    pack = max(8, 8 * (4 // max(1, min(isz_p, isz_g))))

    # Split the row range across a second "parallel" grid slot when N == 1 so a
    # dual-TensorCore part (v7x) isn't half idle. Harmless on v5e/v6e.
    split = 2 if (N == 1 and rows >= 256) else 1

    # Cap the block so 2 inputs x 2 pipeline buffers stay well under VMEM
    # (also on v7x's 64 MiB physical).
    cap_rows = max(pack, (12 * 2**20) // (LANES * (isz_p + isz_g)))
    trmax = max(pack, min(tile_rows, cap_rows))
    trmax = max(pack, (trmax // pack) * pack)

    def tiling(p):
        k = max(1, _cdiv(rows, split * trmax))
        tr = _round_up(_cdiv(rows, split * k), p)
        return k, tr

    K, TR = tiling(pack)
    if pack > 8 and split * K * TR != rows:
        k8, tr8 = tiling(8)
        if split * k8 * tr8 == rows:      # exact (mask-free) tiling beats pack
            K, TR = k8, tr8
    rows_grid = split * K * TR            # rows streamed per sample

    # Tail handling:
    #  * D % 128 != 0 -> the lane reshape needs a zero-pad copy anyway, so pad
    #    straight to the tile grid and skip the in-kernel mask.
    #  * otherwise    -> NO pad copy; a row mask zeroes any tile-grid overhang.
    if d_ceil != D:
        arr_rows = rows_grid
        needs_mask = False
        # TODO(synk): this zero-pad is an extra HBM pass; guarantee D % 128 == 0
        # upstream to avoid it entirely.
    else:
        arr_rows = rows
        needs_mask = rows_grid != rows

    def to3d(a):
        a2 = a.reshape(N, D)
        if arr_rows * LANES != D:
            a2 = jnp.pad(a2, ((0, 0), (0, arr_rows * LANES - D)))
        return a2.reshape(N, arr_rows, LANES)

    pred3d = to3d(y_pred)                 # native dtype, no wrapper f32 cast
    gt3d = to3d(y_true)

    cr = max(8, (min(chunk_rows, TR) // 8) * 8)

    kernel = functools.partial(
        _dice_ce_kernel, tile_rows=TR, chunk_rows=cr, k_steps=K,
        rows_valid=rows, needs_mask=needs_mask)

    last_block = (arr_rows - 1) // TR     # defensive clamp for overhanging blocks

    def in_map(n, s, k):
        return (n, jnp.minimum(s * K + k, last_block), 0)

    in_block = pl.BlockSpec((1, TR, LANES), in_map)
    out_block = pl.BlockSpec((1, 1, 3, LANES), lambda n, s, k: (n, s, 0, 0))

    elems = N * rows_grid * LANES
    cost = pl.CostEstimate(
        flops=9 * elems,
        transcendentals=2 * elems,
        bytes_accessed=N * arr_rows * LANES * (isz_p + isz_g)
        + N * split * 3 * LANES * 4)

    vmem_need = 2 * TR * LANES * (isz_p + isz_g)     # double-buffered inputs
    vmem_limit = int(min(48 * 2**20, max(32 * 2**20, vmem_need + 16 * 2**20)))

    acc = pl.pallas_call(
        kernel,
        out_shape=jax.ShapeDtypeStruct((N, split, 3, LANES), jnp.float32),
        grid_spec=pltpu.PrefetchScalarGridSpec(
            num_scalar_prefetch=0,
            grid=(N, split, K),
            in_specs=[in_block, in_block],
            out_specs=out_block,
        ),
        compiler_params=pltpu.CompilerParams(
            dimension_semantics=("parallel", "parallel", "arbitrary"),
            vmem_limit_bytes=vmem_limit),
        cost_estimate=cost,
    )(pred3d, gt3d)

    # Tiny JAX epilogue: finish lane/split reductions + exact corrections.
    per_sample = jnp.sum(acc, axis=(1, 3))           # (N, 3)
    tp_n = per_sample[:, 0]                          # sum(x*y)       per sample
    xy_n = per_sample[:, 1]                          # sum(x)+sum(y)  per sample
    s3_n = per_sample[:, 2]                          # sum(relu+softplus)

    pad_elems = rows_grid * LANES - D                # zeroed elems per sample
    bce_sum = jnp.sum(s3_n) - jnp.sum(tp_n) - N * pad_elems * LN2
    ce = bce_sum / (N * D)                           # BCEWithLogitsLoss (mean)

    dice_coeff = jnp.mean((2.0 * tp_n + eps) / (xy_n + eps))
    return beta * (1.0 - dice_coeff) + (1.0 - beta) * ce


def _reference(y_pred, y_true, beta=0.5, eps=EPS):
    # Pure-JAX reference mirroring the PyTorch module (activation=None dice).
    N = y_pred.shape[0]
    x = y_pred.reshape(N, -1).astype(jnp.float32)
    y = y_true.reshape(N, -1).astype(jnp.float32)
    tp = jnp.sum(y * x, axis=1)
    fp = jnp.sum(x, axis=1) - tp
    fn = jnp.sum(y, axis=1) - tp
    dice = jnp.sum((2 * tp + eps) / (2 * tp + fp + fn + eps)) / N
    dice_loss = 1.0 - dice
    bce = jnp.mean(jnp.maximum(x, 0.0) - x * y + jnp.log1p(jnp.exp(-jnp.abs(x))))
    return beta * dice_loss + (1 - beta) * bce


if __name__ == "__main__":
    key = jax.random.PRNGKey(0)
    k1, k2, k3, k4 = jax.random.split(key, 4)

    # 1) f32 NCHW, divides cleanly (no pad, no mask).
    y_pred = jax.random.normal(k1, (2, 4, 16, 16), dtype=jnp.float32)
    y_true = (jax.random.uniform(k2, (2, 4, 16, 16)) > 0.5).astype(jnp.float32)
    loss = jax.block_until_ready(dice_ce_loss(y_pred, y_true))
    ref = _reference(y_pred, y_true)
    assert jnp.allclose(loss, ref, rtol=1e-5, atol=1e-5), (loss, ref)

    # 2) bf16 inputs (half the HBM bytes; widened to f32 inside the kernel).
    loss_bf16 = jax.block_until_ready(
        dice_ce_loss(y_pred.astype(jnp.bfloat16), y_true.astype(jnp.bfloat16)))
    assert jnp.allclose(loss_bf16, ref, rtol=5e-2, atol=5e-2), (loss_bf16, ref)

    # 3) D % 128 != 0 -> pad-to-tile-grid path with ln2 epilogue correction.
    yp3 = jax.random.normal(k3, (2, 3, 20, 20), dtype=jnp.float32)
    yt3 = (jax.random.uniform(k4, (2, 3, 20, 20)) > 0.5).astype(jnp.float32)
    loss3 = jax.block_until_ready(dice_ce_loss(yp3, yt3))
    ref3 = _reference(yp3, yt3)
    assert jnp.allclose(loss3, ref3, rtol=1e-4, atol=1e-4), (loss3, ref3)

    # 4) D % 128 == 0 but rows not tile-aligned -> no-pad masked-overhang path
    #    (forced via a small tile so the reduction axis has 2 steps).
    yp4 = jax.random.normal(k1, (2, 5, 16, 16), dtype=jnp.float32)
    yt4 = (jax.random.uniform(k2, (2, 5, 16, 16)) > 0.5).astype(jnp.float32)
    loss4 = jax.block_until_ready(dice_ce_loss(yp4, yt4, tile_rows=8))
    ref4 = _reference(yp4, yt4)
    assert jnp.allclose(loss4, ref4, rtol=1e-4, atol=1e-4), (loss4, ref4)

    # 5) N == 1 -> row-split (dual-core) path + chunked fori_loop body.
    yp5 = jax.random.normal(k3, (1, 4, 128, 128), dtype=jnp.float32)
    yt5 = (jax.random.uniform(k4, (1, 4, 128, 128)) > 0.5).astype(jnp.float32)
    loss5 = jax.block_until_ready(dice_ce_loss(yp5, yt5))
    ref5 = _reference(yp5, yt5)
    assert jnp.allclose(loss5, ref5, rtol=1e-4, atol=1e-4), (loss5, ref5)

    print("KERNEL_OK")
</pallas_src>

<mosaic_0001>
module attributes {stable_mosaic.version = 11 : i64} {
  func.func @_dice_ce_kernel(%arg0: i32, %arg1: i32, %arg2: i32, %arg3: memref<1x8x128xf32, #tpu.memory_space<vmem>>, %arg4: memref<1x8x128xf32, #tpu.memory_space<vmem>>, %arg5: memref<1x1x3x128xf32, #tpu.memory_space<vmem>>) attributes {dimension_semantics = [#tpu.dimension_semantics<parallel>, #tpu.dimension_semantics<parallel>, #tpu.dimension_semantics<arbitrary>], iteration_bounds = array<i64: 2, 1, 1>, scalar_prefetch = 0 : i64, scratch_operands = 0 : i64, tpu.core_type = #tpu.core_type<tc>, window_params = [{transform_indices = @transform_0, window_bounds = array<i64: 1, 8, 128>}, {transform_indices = @transform_1, window_bounds = array<i64: 1, 8, 128>}, {transform_indices = @transform_2, window_bounds = array<i64: 1, 1, 3, 128>}]} {
    %c0_i32 = arith.constant 0 : i32
    %0 = arith.cmpi eq, %arg2, %c0_i32 : i32
    %1 = arith.extui %0 : i1 to i32
    %c0_i32_0 = arith.constant 0 : i32
    %2 = arith.cmpi ne, %1, %c0_i32_0 : i32
    scf.if %2 {
      %cst_21 = arith.constant 0.000000e+00 : f32
      %34 = vector.broadcast %cst_21 : f32 to vector<1x1x3x128xf32>
      %c0_22 = arith.constant 0 : index
      %c0_23 = arith.constant 0 : index
      %c0_24 = arith.constant 0 : index
      %c0_25 = arith.constant 0 : index
      %35 = vector.load %arg5[%c0_22, %c0_23, %c0_24, %c0_25] : memref<1x1x3x128xf32, #tpu.memory_space<vmem>>, vector<1x1x3x128xf32>
      tpu.vector_store %arg5[%c0_22, %c0_23, %c0_24, %c0_25], %34 {strides = array<i32>} : memref<1x1x3x128xf32, #tpu.memory_space<vmem>>, vector<1x1x3x128xf32>,
    } else {
    }
    %cst = arith.constant 0.000000e+00 : f32
    %3 = vector.broadcast %cst : f32 to vector<1x128xf32>
    %cst_1 = arith.constant 0.000000e+00 : f32
    %4 = vector.broadcast %cst_1 : f32 to vector<1x128xf32>
    %cst_2 = arith.constant 0.000000e+00 : f32
    %5 = vector.broadcast %cst_2 : f32 to vector<1x128xf32>
    %c0 = arith.constant 0 : index
    %c0_3 = arith.constant 0 : index
    %c0_4 = arith.constant 0 : index
    %6 = vector.load %arg3[%c0, %c0_3, %c0_4] : memref<1x8x128xf32, #tpu.memory_space<vmem>>, vector<1x8x128xf32>
    %7 = vector.shape_cast %6 : vector<1x8x128xf32> to vector<8x128xf32>
    %c0_5 = arith.constant 0 : index
    %c0_6 = arith.constant 0 : index
    %c0_7 = arith.constant 0 : index
    %8 = vector.load %arg4[%c0_5, %c0_6, %c0_7] : memref<1x8x128xf32, #tpu.memory_space<vmem>>, vector<1x8x128xf32>
    %9 = vector.shape_cast %8 : vector<1x8x128xf32> to vector<8x128xf32>
    %10 = arith.mulf %7, %9 : vector<8x128xf32>
    %cst_8 = arith.constant dense<0.000000e+00> : vector<128xf32>
    %11 = vector.multi_reduction <add>, %10, %cst_8 [0] : vector<8x128xf32> to vector<128xf32>
    %12 = vector.shape_cast %11 : vector<128xf32> to vector<1x128xf32>
    %13 = arith.addf %3, %12 : vector<1x128xf32>
    %14 = arith.addf %7, %9 : vector<8x128xf32>
    %cst_9 = arith.constant dense<0.000000e+00> : vector<128xf32>
    %15 = vector.multi_reduction <add>, %14, %cst_9 [0] : vector<8x128xf32> to vector<128xf32>
    %16 = vector.shape_cast %15 : vector<128xf32> to vector<1x128xf32>
    %17 = arith.addf %4, %16 : vector<1x128xf32>
    %cst_10 = arith.constant 0.000000e+00 : f32
    %18 = vector.broadcast %cst_10 : f32 to vector<8x128xf32>
    %19 = arith.maximumf %7, %18 : vector<8x128xf32>
    %20 = math.absf %7 : vector<8x128xf32>
    %cst_11 = arith.constant 0.000000e+00 : f32
    %21 = vector.broadcast %cst_11 : f32 to vector<8x128xf32>
    %22 = arith.subf %21, %20 : vector<8x128xf32>
    %23 = math.exp %22 : vector<8x128xf32>
    %24 = math.log1p %23 : vector<8x128xf32>
    %25 = arith.addf %19, %24 : vector<8x128xf32>
    %cst_12 = arith.constant dense<0.000000e+00> : vector<128xf32>
    %26 = vector.multi_reduction <add>, %25, %cst_12 [0] : vector<8x128xf32> to vector<128xf32>
    %27 = vector.shape_cast %26 : vector<128xf32> to vector<1x128xf32>
    %28 = arith.addf %5, %27 : vector<1x128xf32>
    %29 = tpu.concatenate %13, %17, %28 in 0 : vector<1x128xf32>, vector<1x128xf32>, vector<1x128xf32> -> vector<3x128xf32>
    %c0_13 = arith.constant 0 : index
    %c0_14 = arith.constant 0 : index
    %c0_15 = arith.constant 0 : index
    %c0_16 = arith.constant 0 : index
    %30 = vector.load %arg5[%c0_13, %c0_14, %c0_15, %c0_16] : memref<1x1x3x128xf32, #tpu.memory_space<vmem>>, vector<1x1x3x128xf32>
    %31 = vector.shape_cast %29 : vector<3x128xf32> to vector<1x1x3x128xf32>
    %32 = arith.addf %30, %31 : vector<1x1x3x128xf32>
    %c0_17 = arith.constant 0 : index
    %c0_18 = arith.constant 0 : index
    %c0_19 = arith.constant 0 : index
    %c0_20 = arith.constant 0 : index
    %33 = vector.load %arg5[%c0_17, %c0_18, %c0_19, %c0_20] : memref<1x1x3x128xf32, #tpu.memory_space<vmem>>, vector<1x1x3x128xf32>
    tpu.vector_store %arg5[%c0_17, %c0_18, %c0_19, %c0_20], %32 {strides = array<i32>} : memref<1x1x3x128xf32, #tpu.memory_space<vmem>>, vector<1x1x3x128xf32>,
    return
  }
  func.func @transform_0(%arg0: i32, %arg1: i32, %arg2: i32) -> (i32, i32, i32) {
    %c1_i32 = arith.constant 1 : i32
    %0 = arith.muli %arg1, %c1_i32 : i32
    %1 = arith.addi %0, %arg2 : i32
    %c0_i32 = arith.constant 0 : i32
    %2 = arith.minsi %1, %c0_i32 : i32
    %c0_i32_0 = arith.constant 0 : i32
    %c0_i32_1 = arith.constant 0 : i32
    return %arg0, %2, %c0_i32_0 : i32, i32, i32
  }
  func.func @transform_1(%arg0: i32, %arg1: i32, %arg2: i32) -> (i32, i32, i32) {
    %c1_i32 = arith.constant 1 : i32
    %0 = arith.muli %arg1, %c1_i32 : i32
    %1 = arith.addi %0, %arg2 : i32
    %c0_i32 = arith.constant 0 : i32
    %2 = arith.minsi %1, %c0_i32 : i32
    %c0_i32_0 = arith.constant 0 : i32
    %c0_i32_1 = arith.constant 0 : i32
    return %arg0, %2, %c0_i32_0 : i32, i32, i32
  }
  func.func @transform_2(%arg0: i32, %arg1: i32, %arg2: i32) -> (i32, i32, i32, i32) {
    %c0_i32 = arith.constant 0 : i32
    %c0_i32_0 = arith.constant 0 : i32
    %c0_i32_1 = arith.constant 0 : i32
    return %arg0, %arg1, %c0_i32, %c0_i32_0 : i32, i32, i32, i32
  }
}

</mosaic_0001>

<llo_original>
// kernel: tpu_custom_call.1
$region0: #{tpu_custom_call.1}
  #allocation0 [shape = 'u32[]', space=smem, size = 0x4, offset = 0x4, fixed_abs, tag = 'smem constant byte address 0x4 - core index']
  #allocation1 [shape = 'u32[144,128]{1,0:T(1,128)}', space=vmem, size = 0x12000, scoped, tag = 'internal scratch']
  %s0 = inlined_call_operand.hbm [shape: f32[2,8,128], index: 0, kind: input, shape index: {}]
  %s1 = inlined_call_operand.hbm [shape: f32[2,8,128], index: 1, kind: input, shape index: {}]
  %s2 = inlined_call_operand.vmem [shape: f32[2,1,3,128], index: 2, kind: output, shape index: {}]
  %s3 = sld [smem:[#allocation0]]
  $region53: #{tpu_custom_call.1} parent=0
    _
  %s5 = ssub.s32 1, %s3
  %s6 = scalar_select 0, %s5, %s3
  $region1: #{tpu_custom_call.1} parent=0
    #allocation2 [shape = 'u8[8192]{0}', space=vmem, size = 0x2000, scoped, tag = 'input window, operand 0']
    #allocation3 [shape = 's32[2]{0}', space=sflag, size = 0x8, scoped, tag = 'scoped memory for tpu_custom_call.1']
    #allocation4 [shape = 'u8[8192]{0}', space=vmem, size = 0x2000, scoped, tag = 'input window, operand 1']
    #allocation5 [shape = 's32[2]{0}', space=sflag, size = 0x8, scoped, tag = 'scoped memory for tpu_custom_call.1']
    %7 = vsyncpa [#allocation3], 0
    %s8 = scalar_lea.sflag [#allocation3], 1
    %9 = vsyncpa %s8, 0
    %10 = vsyncpa [#allocation5], 0
    %s11 = scalar_lea.sflag [#allocation5], 1
    %12 = vsyncpa %s11, 0
    loop: start=0, step=1, limit=4
    $region2: #{tpu_custom_call.1} parent=1 // loop_pre_header
      _
    $region3: #{tpu_custom_call.1} parent=1 // loop_header
      %s14 = sphi 0, %s18
      %p15 = scmp.ge.s32.totalorder %s14, 4
      %s21 = sphi 0, %s40
      %s22 = sphi 0, %s36
      %s23 = sphi 0, %s32
      %s24 = sphi 0, %s21
      %s25 = sphi 0, %s22
      %s26 = sphi 0, %s23
      %s27 = sphi 0, %s24
      %s28 = sphi 0, %s25
      %s29 = sphi 0, %s26
      %s51 = sphi 0, %s53
      %s54 = sphi 0, %s51
      %s55 = sphi 0, %s54
      %s71 = sphi 0, %s55
      %s85 = sphi 0, %s87
      %s88 = sphi 0, %s85
      %s89 = sphi 0, %s88
      %s105 = sphi 0, %s89
      %s113 = sphi 0, %s115
      %s116 = sphi 0, %s113
      %s117 = sphi 0, %s116
      %s133 = sphi 0, %s117
    $region4: #{tpu_custom_call.1} parent=1 // loop_header_branch
      %17 = sbr.rel (%p15) target = $region8
    $region5: #{tpu_custom_call.1} parent=1 // loop_body
      %s19 = ssub.s32 %s14, 1
      %s20 = ssub.s32 %s14, 2
      %s30 = sadd.s32 1, %s23
      %p31 = scmp.ge.s32.totalorder %s30, 1
      %s32 = scalar_select %p31, 0, %s30
      %s33 = sadd.s32 1, %s22
      %s34 = scalar_select %p31, %s33, %s22
      %p35 = scmp.ge.s32.totalorder %s34, 1
      %s36 = scalar_select %p35, 0, %s34
      %s37 = sadd.s32 1, %s21
      %s38 = scalar_select %p35, %s37, %s21
      %p39 = scmp.ge.s32.totalorder %s38, 2
      %s40 = scalar_select %p39, 0, %s38
      %s41 = sadd.s32 %s22, %s23
      %p42 = scmp.lt.s32.totalorder %s41, 0
      %s43 = scalar_select %p42, %s41, 0
      %s44 = sadd.s32 %s36, %s32
      %p45 = scmp.lt.s32.totalorder %s44, 0
      %s46 = scalar_select %p45, %s44, 0
      %s47 = ssub.s32 %s21, %s40
      %s48 = ssub.s32 %s43, %s46
      %s49 = sor.u32 %s47, %s48
      %p50 = scmp.eq.s32.totalorder %s49, 0
      %s52 = sadd.s32 %s51, 1
      %s53 = scalar_select %p50, %s51, %s52
      %p56 = pneg %p50
      %p57 = scmp.eq.s32.totalorder %s14, 1
      %p58 = por %p56, %p57
      %p59 = scmp.ne.s32.totalorder %s51, %s54
      %p60 = scmp.eq.s32.totalorder %s14, 0
      %p61 = por %p59, %p60
      %p62 = scmp.ne.s32.totalorder %s51, %s54
      %p63 = scmp.eq.s32.totalorder %s19, 1
      %p64 = por %p62, %p63
      %p65 = scmp.ne.s32.totalorder %s54, %s55
      %p66 = scmp.eq.s32.totalorder %s19, 0
      %p67 = por %p65, %p66
      %p68 = scmp.ne.s32.totalorder %s54, %s55
      %p69 = scmp.eq.s32.totalorder %s20, 1
      %p70 = por %p68, %p69
      %p72 = scmp.ne.s32.totalorder %s55, %s71
      %p73 = scmp.eq.s32.totalorder %s20, 0
      %p74 = por %p72, %p73
      %s75 = sadd.s32 %s22, %s23
      %p76 = scmp.lt.s32.totalorder %s75, 0
      %s77 = scalar_select %p76, %s75, 0
      %s78 = sadd.s32 %s36, %s32
      %p79 = scmp.lt.s32.totalorder %s78, 0
      %s80 = scalar_select %p79, %s78, 0
      %s81 = ssub.s32 %s21, %s40
      %s82 = ssub.s32 %s77, %s80
      %s83 = sor.u32 %s81, %s82
      %p84 = scmp.eq.s32.totalorder %s83, 0
      %s86 = sadd.s32 %s85, 1
      %s87 = scalar_select %p84, %s85, %s86
      %p90 = pneg %p84
      %p91 = scmp.eq.s32.totalorder %s14, 1
      %p92 = por %p90, %p91
      %p93 = scmp.ne.s32.totalorder %s85, %s88
      %p94 = scmp.eq.s32.totalorder %s14, 0
      %p95 = por %p93, %p94
      %p96 = scmp.ne.s32.totalorder %s85, %s88
      %p97 = scmp.eq.s32.totalorder %s19, 1
      %p98 = por %p96, %p97
      %p99 = scmp.ne.s32.totalorder %s88, %s89
      %p100 = scmp.eq.s32.totalorder %s19, 0
      %p101 = por %p99, %p100
      %p102 = scmp.ne.s32.totalorder %s88, %s89
      %p103 = scmp.eq.s32.totalorder %s20, 1
      %p104 = por %p102, %p103
      %p106 = scmp.ne.s32.totalorder %s89, %s105
      %p107 = scmp.eq.s32.totalorder %s20, 0
      %p108 = por %p106, %p107
      %s109 = ssub.s32 %s21, %s40
      %s110 = ssub.s32 %s22, %s36
      %s111 = sor.u32 %s109, %s110
      %p112 = scmp.eq.s32.totalorder %s111, 0
      %s114 = sadd.s32 %s113, 1
      %s115 = scalar_select %p112, %s113, %s114
      %p118 = pneg %p112
      %p119 = scmp.eq.s32.totalorder %s14, 1
      %p120 = por %p118, %p119
      %p121 = scmp.ne.s32.totalorder %s113, %s116
      %p122 = scmp.eq.s32.totalorder %s14, 0
      %p123 = por %p121, %p122
      %p124 = scmp.ne.s32.totalorder %s113, %s116
      %p125 = scmp.eq.s32.totalorder %s19, 1
      %p126 = por %p124, %p125
      %p127 = scmp.ne.s32.totalorder %s116, %s117
      %p128 = scmp.eq.s32.totalorder %s19, 0
      %p129 = por %p127, %p128
      %p130 = scmp.ne.s32.totalorder %s116, %s117
      %p131 = scmp.eq.s32.totalorder %s20, 1
      %p132 = por %p130, %p131
      %p134 = scmp.ne.s32.totalorder %s117, %s133
      %p135 = scmp.eq.s32.totalorder %s20, 0
      %p136 = por %p134, %p135
      %p137 = scmp.le.s32.totalorder 1, %s14
      %p138 = scmp.lt.s32.totalorder %s14, 3
      %p139 = pnand %p137, %p138
      %p140 = pneg %p139
      // Predicated region
      $region9: #{tpu_custom_call.1} parent=5 // pred_check
        _
      $region10: #{tpu_custom_call.1} parent=5 // pred_check_branch
        %142 = sbr.rel (%p139) target = $region12
      $region11: #{tpu_custom_call.1} parent=5 // pred_region
        %s143 = ssub.s32 %s14, 1
      $region12: #{tpu_custom_call.1} parent=5 // pred_fallthru
        _
      %p144 = scmp.lt.s32.totalorder %s14, 2
      // Predicated region
      $region13: #{tpu_custom_call.1} parent=5 // pred_check
        %p145 = pneg %p144
      $region14: #{tpu_custom_call.1} parent=5 // pred_check_branch
        %147 = sbr.rel (%p145) target = $region16
      $region15: #{tpu_custom_call.1} parent=5 // pred_region
        // Predicated region
        $region17: #{tpu_custom_call.1} parent=15 // pred_check
          %p148 = pneg %p61
        $region18: #{tpu_custom_call.1} parent=15 // pred_check_branch
          %150 = sbr.rel (%p148) target = $region20
        $region19: #{tpu_custom_call.1} parent=15 // pred_region
          %s151 = sand.u32 %s51, 1
          %s152 = scalar_lea.sflag [#allocation3], %s151
          %s153 = sand.u32 %s51, 1
          %s154 = smul.addr %s153, 8
          %s155 = scalar_lea.vmem [#allocation2], %s154
          %s156 = sadd.s32 %s22, %s23
          %p157 = scmp.lt.s32.totalorder %s156, 0
          %s158 = scalar_select %p157, %s156, 0
          %s160 = ssub.s32 128, 128
          %161 = vsyncadd %s152, %s160
          %s162 = sadd.s32 %s158, %s21
          %s163 = smul.addr %s162, 128
          %s164 = scalar_lea.hbm %s0, %s163
          %s166 = sshll.u32 %s155, 4
          %s167 = int_to_ptr.vmem [resolvable:$true] %s166
          %169 = dma.hbm_to_vmem [thread:$0]  %s164, 128, %s167, %s152
        $region20: #{tpu_custom_call.1} parent=15 // pred_fallthru
          _
        // Predicated region
        $region21: #{tpu_custom_call.1} parent=15 // pred_check
          %p170 = pneg %p95
        $region22: #{tpu_custom_call.1} parent=15 // pred_check_branch
          %172 = sbr.rel (%p170) target = $region24
        $region23: #{tpu_custom_call.1} parent=15 // pred_region
          %s173 = sand.u32 %s85, 1
          %s174 = scalar_lea.sflag [#allocation5], %s173
          %s175 = sand.u32 %s85, 1
          %s176 = smul.addr %s175, 8
          %s177 = scalar_lea.vmem [#allocation4], %s176
          %s178 = sadd.s32 %s22, %s23
          %p179 = scmp.lt.s32.totalorder %s178, 0
          %s180 = scalar_select %p179, %s178, 0
          %s182 = ssub.s32 128, 128
          %183 = vsyncadd %s174, %s182
          %s184 = sadd.s32 %s180, %s21
          %s185 = smul.addr %s184, 128
          %s186 = scalar_lea.hbm %s1, %s185
          %s188 = sshll.u32 %s177, 4
          %s189 = int_to_ptr.vmem [resolvable:$true] %s188
          %191 = dma.hbm_to_vmem [thread:$0]  %s186, 128, %s189, %s174
        $region24: #{tpu_custom_call.1} parent=15 // pred_fallthru
          _
      $region16: #{tpu_custom_call.1} parent=5 // pred_fallthru
        _
      %p192 = scmp.le.s32.totalorder 1, %s14
      %p193 = scmp.lt.s32.totalorder %s14, 3
      %p194 = pnand %p192, %p193
      %p195 = pneg %p194
      // Predicated region
      $region25: #{tpu_custom_call.1} parent=5 // pred_check
        _
      $region26: #{tpu_custom_call.1} parent=5 // pred_check_branch
        %197 = sbr.rel (%p194) target = $region28
      $region27: #{tpu_custom_call.1} parent=5 // pred_region
        %s198 = ssub.s32 %s14, 1
        %s199 = sand.u32 %s54, 1
        %s200 = scalar_lea.sflag [#allocation3], %s199
        %s201 = sand.u32 %s54, 1
        %s202 = smul.addr %s201, 8
        %s203 = scalar_lea.vmem [#allocation2], %s202
        // Predicated region
        $region29: #{tpu_custom_call.1} parent=27 // pred_check
          %p204 = pneg %p67
        $region30: #{tpu_custom_call.1} parent=27 // pred_check_branch
          %206 = sbr.rel (%p204) target = $region32
        $region31: #{tpu_custom_call.1} parent=27 // pred_region
          %207 = dma.done %s200, 128
        $region32: #{tpu_custom_call.1} parent=27 // pred_fallthru
          _
        %s208 = sand.u32 %s88, 1
        %s209 = scalar_lea.sflag [#allocation5], %s208
        %s210 = sand.u32 %s88, 1
        %s211 = smul.addr %s210, 8
        %s212 = scalar_lea.vmem [#allocation4], %s211
        // Predicated region
        $region33: #{tpu_custom_call.1} parent=27 // pred_check
          %p213 = pneg %p101
        $region34: #{tpu_custom_call.1} parent=27 // pred_check_branch
          %215 = sbr.rel (%p213) target = $region36
        $region35: #{tpu_custom_call.1} parent=27 // pred_region
          %216 = dma.done %s209, 128
        $region36: #{tpu_custom_call.1} parent=27 // pred_fallthru
          _
        %s217 = sand.u32 %s54, 1
        %s218 = scalar_lea.sflag [#allocation3], %s217
        %s219 = sand.u32 %s54, 1
        %s220 = smul.addr %s219, 8
        %s221 = scalar_lea.vmem [#allocation2], %s220
        %p222 = pneg %p67
        %p223 = pneg %p64
        %s224 = sand.u32 %s88, 1
        %s225 = scalar_lea.sflag [#allocation5], %s224
        %s226 = sand.u32 %s88, 1
        %s227 = smul.addr %s226, 8
        %s228 = scalar_lea.vmem [#allocation4], %s227
        %p229 = pneg %p101
        %p230 = pneg %p98
        %p231 = pneg %p129
        %p232 = pneg %p126
        %p233 = scmp.lt.s32.totalorder %s24, 1
        %s234 = scalar_select %p233, %s24, 1
        %p235 = scmp.lt.s32.totalorder %s25, 0
        %s236 = scalar_select %p235, %s25, 0
        %s237 = sadd.s32 %s236, %s234
        %s238 = smul.addr %s237, 4
        %s239 = scalar_lea.vmem %s2, %s238
        %s240 = sadd.s32 %s25, %s26
        %p241 = scmp.lt.s32.totalorder %s240, 0
        %s242 = scalar_select %p241, %s240, 0
        %s243 = sadd.s32 %s25, %s26
        %p244 = scmp.lt.s32.totalorder %s243, 0
        %s245 = scalar_select %p244, %s243, 0
        %p246 = scmp.lt.s32.totalorder %s24, 1
        %s247 = scalar_select %p246, %s24, 1
        %p248 = scmp.lt.s32.totalorder %s25, 0
        %s249 = scalar_select %p248, %s25, 0
        %s250 = sadd.s32 %s249, %s247
        %s251 = smul.addr %s250, 4
        %s252 = scalar_lea.vmem %s2, %s251
        %p253 = scmp.eq.s32.totalorder %s26, 0
        // Predicated region
        $region37: #{tpu_custom_call.1} parent=27 // pred_check
          %p254 = pneg %p253
        $region38: #{tpu_custom_call.1} parent=27 // pred_check_branch
          %256 = sbr.rel (%p254) target = $region40
        $region39: #{tpu_custom_call.1} parent=27 // pred_region
          %257 = vst [vmem:[%s252] sm:$0x7] 0.0
        $region40: #{tpu_custom_call.1} parent=27 // pred_fallthru
          _
        %v258 = vld [vmem:[%s203] sm:$0xff]
        %v259 = vld [vmem:[%s212] sm:$0xff]
        %v260 = vmul.f32 %v258, %v259
        %v261 = vrot.slane %v260, 4
        %v262 = vadd.f32 %v260, %v261
        %v263 = vrot.slane %v262, 2
        %v264 = vadd.f32 %v262, %v263
        %v265 = vrot.slane %v264, 1
        %v266 = vadd.f32 %v264, %v265
        %v267 = vadd.f32 %v266, 0.0
        %v268 = vadd.f32 %v258, %v259
        %v269 = vrot.slane %v268, 4
        %v270 = vadd.f32 %v268, %v269
        %v271 = vrot.slane %v270, 2
        %v272 = vadd.f32 %v270, %v271
        %v273 = vrot.slane %v272, 1
        %v274 = vadd.f32 %v272, %v273
        %v275 = vadd.f32 %v274, 0.0
        %v276 = vmax.f32 %v258, 0.0
        %v277 = vand.u32 2147483647, %v258
        %v278 = vsub.f32 0.0, %v277
        %v279 = vmul.f32 %v278, 1.442695
        %v280 = vpow.pop %v279
        %v281 = vadd.f32 %v280, 1.0
        %v282 = vlog2.pop %v281
        %v283 = vmul.f32 %v282, 0.6931472
        %v284 = vmul.f32 -0.5, %v280
        %v285 = vadd.f32 %v284, 1.0
        %v286 = vmul.f32 %v285, %v280
        %v287 = vand.u32 2147483647, %v280
        %vm288 = vcmp.lt.f32.partialorder %v287, 0.0004427343
        %v289 = vsel %vm288, %v286, %v283
        %v290 = vadd.f32 %v276, %v289
        %v291 = vrot.slane %v290, 4
        %v292 = vadd.f32 %v290, %v291
        %v293 = vrot.slane %v292, 2
        %v294 = vadd.f32 %v292, %v293
        %v295 = vrot.slane %v294, 1
        %v296 = vadd.f32 %v294, %v295
        %v297 = vadd.f32 %v296, 0.0
        %vm298 = vcmask 1040384
        %v299 = vsel %vm298, %v267, %v275
        %vm300 = vcmask 1041408
        %v301 = vsel %vm300, %v299, %v297
        %v302 = vld [vmem:[%s252] sm:$0x7]
        %v303 = vadd.f32 %v302, %v301
        %304 = vst [vmem:[%s252] sm:$0x7] %v303
        %p305 = scmp.lt.s32.totalorder %s24, 1
        %s306 = scalar_select %p305, %s24, 1
        %p307 = scmp.lt.s32.totalorder %s25, 0
        %s308 = scalar_select %p307, %s25, 0
        %s309 = sadd.s32 %s308, %s306
        %s310 = smul.addr %s309, 4
        %s311 = scalar_lea.vmem %s2, %s310
        // Predicated region
        $region41: #{tpu_custom_call.1} parent=27 // pred_check
          %p312 = pneg %p126
        $region42: #{tpu_custom_call.1} parent=27 // pred_check_branch
          %314 = sbr.rel (%p312) target = $region44
        $region43: #{tpu_custom_call.1} parent=27 // pred_region
          _
        $region44: #{tpu_custom_call.1} parent=27 // pred_fallthru
          _
      $region28: #{tpu_custom_call.1} parent=5 // pred_fallthru
        _
      %p315 = scmp.le.s32.totalorder 2, %s14
      // Predicated region
      $region45: #{tpu_custom_call.1} parent=5 // pred_check
        %p316 = pneg %p315
      $region46: #{tpu_custom_call.1} parent=5 // pred_check_branch
        %318 = sbr.rel (%p316) target = $region48
      $region47: #{tpu_custom_call.1} parent=5 // pred_region
        %s319 = ssub.s32 %s14, 2
        // Predicated region
        $region49: #{tpu_custom_call.1} parent=47 // pred_check
          %p320 = pneg %p132
        $region50: #{tpu_custom_call.1} parent=47 // pred_check_branch
          %322 = sbr.rel (%p320) target = $region52
        $region51: #{tpu_custom_call.1} parent=47 // pred_region
          %p323 = scmp.lt.s32.totalorder %s27, 1
          %s324 = scalar_select %p323, %s27, 1
          %p325 = scmp.lt.s32.totalorder %s28, 0
          %s326 = scalar_select %p325, %s28, 0
          %s327 = sadd.s32 %s326, %s324
          %s328 = smul.addr %s327, 4
          %s329 = scalar_lea.vmem %s2, %s328
        $region52: #{tpu_custom_call.1} parent=47 // pred_fallthru
          _
      $region48: #{tpu_custom_call.1} parent=5 // pred_fallthru
        _
    $region6: #{tpu_custom_call.1} parent=1 // loop_footer
      %s18 = sadd.s32 1, %s14
    $region7: #{tpu_custom_call.1} parent=1 // loop_footer_branch
      %13 = sbr.rel target = $region3
    $region8: #{tpu_custom_call.1} parent=1 // loop_exit
      _
    %330 = vsyncpa [#allocation3], 1
    %s331 = scalar_lea.sflag [#allocation3], 1
    %332 = vsyncpa %s331, 1
    %333 = vsyncpa [#allocation5], 1
    %s334 = scalar_lea.sflag [#allocation5], 1
    %335 = vsyncpa %s334, 1

</llo_original>
